<compile_context>
chip_gen: v7x
topology: tpu7x:2x2x1
jax: 0.10.0
libtpu: 0.0.40
codegen_flags: <defaults>
</compile_context>

<pallas_src>
import functools

import jax
import jax.numpy as jnp
from jax.experimental import pallas as pl
from jax.experimental.pallas import tpu as pltpu

NEG_INF = -1e30


# ------------------------------- helpers ------------------------------------

def _round_up(x, m):
    return ((x + m - 1) // m) * m


def _pad_to(x, shape):
    pads = [(0, s - d) for d, s in zip(x.shape, shape)]
    if all(p == (0, 0) for p in pads):
        return x
    return jnp.pad(x, pads)


# --------------------------- tiled dense (matmul) ----------------------------

def _make_dense_kernel(activation, has_residual):
    def kernel(*refs):
        if has_residual:
            x_ref, w_ref, b_ref, r_ref, o_ref, acc_ref = refs
        else:
            x_ref, w_ref, b_ref, o_ref, acc_ref = refs
            r_ref = None
        k = pl.program_id(2)

        @pl.when(k == 0)
        def _init():
            acc_ref[...] = jnp.zeros_like(acc_ref)

        acc_ref[...] += jnp.dot(x_ref[...], w_ref[...],
                                preferred_element_type=jnp.float32)

        @pl.when(k == pl.num_programs(2) - 1)
        def _fin():
            y = acc_ref[...] + b_ref[...].astype(jnp.float32)
            if activation == "gelu":
                # TODO(synk): torch.nn.GELU defaults to exact erf; tanh approx used here.
                y = jax.nn.gelu(y)
            if r_ref is not None:
                y = y + r_ref[...].astype(jnp.float32)
            o_ref[...] = y.astype(o_ref.dtype)

    return kernel


def pallas_dense(x, w, b, activation=None, residual=None,
                 tm=128, tn=256, tk=256):
    """y = act(x @ w + b) (+ residual).  bf16 MXU inputs, fp32 accumulate."""
    M, K = x.shape
    N = w.shape[1]
    tm = min(tm, _round_up(M, 8))
    tn = min(tn, _round_up(N, 128))
    tk = min(tk, _round_up(K, 128))
    Mp, Np, Kp = _round_up(M, tm), _round_up(N, tn), _round_up(K, tk)

    xp = _pad_to(x, (Mp, Kp)).astype(jnp.bfloat16)
    wp = _pad_to(w, (Kp, Np)).astype(jnp.bfloat16)
    bp = _pad_to(b.reshape(1, N), (1, Np)).astype(jnp.float32)

    in_specs = [pl.BlockSpec((tm, tk), lambda i, j, k: (i, k)),
                pl.BlockSpec((tk, tn), lambda i, j, k: (k, j)),
                pl.BlockSpec((1, tn), lambda i, j, k: (0, j))]
    args = [xp, wp, bp]
    if residual is not None:
        rp = _pad_to(residual, (Mp, Np)).astype(jnp.float32)
        in_specs.append(pl.BlockSpec((tm, tn), lambda i, j, k: (i, j)))
        args.append(rp)

    out = pl.pallas_call(
        _make_dense_kernel(activation, residual is not None),
        out_shape=jax.ShapeDtypeStruct((Mp, Np), jnp.float32),
        grid=(Mp // tm, Np // tn, Kp // tk),
        in_specs=in_specs,
        out_specs=pl.BlockSpec((tm, tn), lambda i, j, k: (i, j)),
        scratch_shapes=[pltpu.VMEM((tm, tn), jnp.float32)],
        compiler_params=pltpu.CompilerParams(
            dimension_semantics=("parallel", "parallel", "arbitrary")),
    )(*args)
    return out[:M, :N]


# ------------------- fused dense + log_softmax (output head) -----------------

def _dense_logsoftmax_kernel(x_ref, w_ref, b_ref, o_ref, acc_ref, *, n_valid):
    k = pl.program_id(1)

    @pl.when(k == 0)
    def _init():
        acc_ref[...] = jnp.zeros_like(acc_ref)

    acc_ref[...] += jnp.dot(x_ref[...], w_ref[...],
                            preferred_element_type=jnp.float32)

    @pl.when(k == pl.num_programs(1) - 1)
    def _fin():
        y = acc_ref[...] + b_ref[...].astype(jnp.float32)
        col = jax.lax.broadcasted_iota(jnp.int32, y.shape, 1)
        y = jnp.where(col < n_valid, y, NEG_INF)       # mask padded vocab cols
        m = jnp.max(y, axis=-1, keepdims=True)
        s = y - m
        lse = jnp.log(jnp.sum(jnp.exp(s), axis=-1, keepdims=True))
        o_ref[...] = (s - lse).astype(o_ref.dtype)


def pallas_dense_logsoftmax(x, w, b, tm=128, tk=256):
    M, K = x.shape
    N = w.shape[1]
    tm = min(tm, _round_up(M, 8))
    tk = min(tk, _round_up(K, 128))
    Np = _round_up(N, 128)
    Mp, Kp = _round_up(M, tm), _round_up(K, tk)

    xp = _pad_to(x, (Mp, Kp)).astype(jnp.bfloat16)
    wp = _pad_to(w, (Kp, Np)).astype(jnp.bfloat16)
    bp = _pad_to(b.reshape(1, N), (1, Np)).astype(jnp.float32)

    out = pl.pallas_call(
        functools.partial(_dense_logsoftmax_kernel, n_valid=N),
        out_shape=jax.ShapeDtypeStruct((Mp, Np), jnp.float32),
        grid=(Mp // tm, Kp // tk),
        in_specs=[pl.BlockSpec((tm, tk), lambda i, k: (i, k)),
                  pl.BlockSpec((tk, Np), lambda i, k: (k, 0)),
                  pl.BlockSpec((1, Np), lambda i, k: (0, 0))],
        out_specs=pl.BlockSpec((tm, Np), lambda i, k: (i, 0)),
        scratch_shapes=[pltpu.VMEM((tm, Np), jnp.float32)],
        compiler_params=pltpu.CompilerParams(
            dimension_semantics=("parallel", "arbitrary")),
    )(xp, wp, bp)
    return out[:M, :N]


# ------------------------------- LayerNorm -----------------------------------

def _layernorm_kernel(x_ref, g_ref, b_ref, o_ref):
    x = x_ref[...].astype(jnp.float32)
    mu = jnp.mean(x, axis=-1, keepdims=True)
    var = jnp.mean((x - mu) ** 2, axis=-1, keepdims=True)
    y = (x - mu) * jax.lax.rsqrt(var + 1e-5)
    o_ref[...] = (y * g_ref[...] + b_ref[...]).astype(o_ref.dtype)


def pallas_layernorm(x, g, b, tm=256):
    M, D = x.shape
    tm = min(tm, _round_up(M, 8))
    Mp = _round_up(M, tm)
    xp = _pad_to(x, (Mp, D))
    out = pl.pallas_call(
        _layernorm_kernel,
        out_shape=jax.ShapeDtypeStruct((Mp, D), jnp.float32),
        grid=(Mp // tm,),
        in_specs=[pl.BlockSpec((tm, D), lambda i: (i, 0)),
                  pl.BlockSpec((1, D), lambda i: (0, 0)),
                  pl.BlockSpec((1, D), lambda i: (0, 0))],
        out_specs=pl.BlockSpec((tm, D), lambda i: (i, 0)),
        compiler_params=pltpu.CompilerParams(dimension_semantics=("parallel",)),
    )(xp, g.reshape(1, D), b.reshape(1, D))
    return out[:M]


# -------------------------- flash-style attention ----------------------------

def _flash_attn_kernel(q_ref, k_ref, v_ref, o_ref, m_sc, l_sc, acc_sc,
                       *, tkv, t_valid, scale):
    kv = pl.program_id(1)

    @pl.when(kv == 0)
    def _init():
        m_sc[...] = jnp.full_like(m_sc, NEG_INF)
        l_sc[...] = jnp.zeros_like(l_sc)
        acc_sc[...] = jnp.zeros_like(acc_sc)

    q = q_ref[...]
    k = k_ref[...]
    v = v_ref[...]
    s = jnp.einsum('bqd,bkd->bqk', q, k,
                   preferred_element_type=jnp.float32) * scale
    col = jax.lax.broadcasted_iota(jnp.int32, s.shape, 2) + kv * tkv
    s = jnp.where(col < t_valid, s, NEG_INF)            # mask padded keys

    m_new = jnp.maximum(m_sc[...], s.max(-1, keepdims=True))
    alpha = jnp.exp(m_sc[...] - m_new)
    p = jnp.exp(s - m_new)
    l_sc[...] = alpha * l_sc[...] + p.sum(-1, keepdims=True)
    acc_sc[...] = alpha * acc_sc[...] + jnp.einsum(
        'bqk,bkd->bqd', p.astype(v.dtype), v, preferred_element_type=jnp.float32)
    m_sc[...] = m_new

    @pl.when(kv == pl.num_programs(1) - 1)
    def _fin():
        o_ref[...] = (acc_sc[...] * pl.reciprocal(l_sc[...], approx=True)
                      ).astype(o_ref.dtype)


def pallas_flash_attention(q, k, v):
    B, T, D = q.shape
    tile = 128 if T >= 128 else _round_up(T, 8)
    Tp = _round_up(T, tile)
    qp = _pad_to(q, (B, Tp, D)).astype(jnp.bfloat16)
    kp = _pad_to(k, (B, Tp, D)).astype(jnp.bfloat16)
    vp = _pad_to(v, (B, Tp, D)).astype(jnp.bfloat16)

    kernel = functools.partial(_flash_attn_kernel, tkv=tile, t_valid=T,
                               scale=1.0 / (D ** 0.5))
    out = pl.pallas_call(
        kernel,
        out_shape=jax.ShapeDtypeStruct((B, Tp, D), jnp.float32),
        grid=(Tp // tile, Tp // tile),
        in_specs=[pl.BlockSpec((B, tile, D), lambda qi, ki: (0, qi, 0)),
                  pl.BlockSpec((B, tile, D), lambda qi, ki: (0, ki, 0)),
                  pl.BlockSpec((B, tile, D), lambda qi, ki: (0, ki, 0))],
        out_specs=pl.BlockSpec((B, tile, D), lambda qi, ki: (0, qi, 0)),
        scratch_shapes=[pltpu.VMEM((B, tile, 1), jnp.float32),
                        pltpu.VMEM((B, tile, 1), jnp.float32),
                        pltpu.VMEM((B, tile, D), jnp.float32)],
        compiler_params=pltpu.CompilerParams(
            dimension_semantics=("parallel", "arbitrary")),
    )(qp, kp, vp)
    return out[:, :T, :]


# ------------------- fused residual vector quantization ----------------------

def _rvq_kernel(x_ref, cb_ref, q_ref, loss_ref, loss_acc,
                *, num_cb, m_valid, tm, denom):
    i = pl.program_id(0)

    @pl.when(i == 0)
    def _init():
        loss_acc[...] = jnp.zeros_like(loss_acc)

    res = x_ref[...].astype(jnp.float32)                        # (tm, D)
    row_ids = jax.lax.broadcasted_iota(jnp.int32, res.shape, 0) + i * tm
    valid = row_ids < m_valid                                   # mask padded rows

    quant = jnp.zeros_like(res)
    loss = jnp.zeros((1, 1), jnp.float32)
    for c in range(num_cb):                                     # unrolled, all in VMEM
        cb = cb_ref[c].astype(jnp.float32)                      # (C, D)
        C = cb.shape[0]
        r2 = jnp.sum(res * res, axis=-1, keepdims=True)
        c2 = jnp.sum(cb * cb, axis=-1, keepdims=True)
        d = r2 - 2.0 * jnp.dot(res, cb.T, preferred_element_type=jnp.float32) + c2.T
        min_d = jnp.min(d, axis=-1, keepdims=True)
        iota = jax.lax.broadcasted_iota(jnp.int32, d.shape, 1)
        idx = jnp.min(jnp.where(d <= min_d, iota, C), axis=-1, keepdims=True)
        onehot = (iota == idx).astype(jnp.float32)
        qc = jnp.dot(onehot, cb, preferred_element_type=jnp.float32)
        diff = jnp.where(valid, res - qc, 0.0)
        # TODO(synk): no stop_gradient (straight-through) — forward-only here.
        loss = loss + jnp.sum(diff * diff, axis=(0, 1), keepdims=True)
        quant = quant + qc
        res = res - qc

    q_ref[...] = quant.astype(q_ref.dtype)
    loss_acc[...] += loss * (1.0 / denom)

    @pl.when(i == pl.num_programs(0) - 1)
    def _fin():
        loss_ref[...] = loss_acc[...]


def pallas_rvq(x, codebooks, tm=128):
    M, D = x.shape
    Ncb, C, _ = codebooks.shape
    tm = min(tm, _round_up(M, 8))
    Mp = _round_up(M, tm)
    xp = _pad_to(x, (Mp, D))

    kernel = functools.partial(_rvq_kernel, num_cb=Ncb, m_valid=M, tm=tm,
                               denom=float(M * D))
    q, loss = pl.pallas_call(
        kernel,
        out_shape=(jax.ShapeDtypeStruct((Mp, D), jnp.float32),
                   jax.ShapeDtypeStruct((1, 1), jnp.float32)),
        grid=(Mp // tm,),
        in_specs=[pl.BlockSpec((tm, D), lambda i: (i, 0)),
                  pl.BlockSpec((Ncb, C, D), lambda i: (0, 0, 0))],
        out_specs=(pl.BlockSpec((tm, D), lambda i: (i, 0)),
                   pl.BlockSpec((1, 1), lambda i: (0, 0))),
        scratch_shapes=[pltpu.VMEM((1, 1), jnp.float32)],
        compiler_params=pltpu.CompilerParams(dimension_semantics=("arbitrary",)),
    )(xp, codebooks)
    return q[:M], loss[0, 0]


# ------------------------------ JAX glue code ---------------------------------

def init_params(key, num_codebooks, codebook_size, embedding_dim, vocab_size,
                strides, num_layers, max_seq_length):
    keys = iter(jax.random.split(key, 128))

    def nrm(shape, scale=0.02):
        return scale * jax.random.normal(next(keys), shape, dtype=jnp.float32)

    D = embedding_dim
    params = {}

    convs = []
    c_in = 1
    for s in strides:
        k = 2 * s
        convs.append({"w": nrm((D, c_in, k)),                 # torch Conv1d (C_out, C_in, K)
                      "b": jnp.zeros((D,), jnp.float32),
                      "stride": s, "kernel": k, "pad": s // 2})
        c_in = D
    params["convs"] = convs

    params["pos_emb"] = nrm((max_seq_length, D))

    layers = []
    for _ in range(num_layers):
        layers.append({
            "ln1_g": jnp.ones((D,), jnp.float32), "ln1_b": jnp.zeros((D,), jnp.float32),
            "wq": nrm((D, D)), "bq": jnp.zeros((D,), jnp.float32),
            "wk": nrm((D, D)), "bk": jnp.zeros((D,), jnp.float32),
            "wv": nrm((D, D)), "bv": jnp.zeros((D,), jnp.float32),
            "wo": nrm((D, D)), "bo": jnp.zeros((D,), jnp.float32),
            "ln2_g": jnp.ones((D,), jnp.float32), "ln2_b": jnp.zeros((D,), jnp.float32),
            "w1": nrm((D, 4 * D)), "b1": jnp.zeros((4 * D,), jnp.float32),
            "w2": nrm((4 * D, D)), "b2": jnp.zeros((D,), jnp.float32),
        })
    params["layers"] = layers

    params["norm_rvq_g"] = jnp.ones((D,), jnp.float32)
    params["norm_rvq_b"] = jnp.zeros((D,), jnp.float32)
    params["codebooks"] = nrm((num_codebooks, codebook_size, D), scale=1.0)
    params["out_w"] = nrm((D, vocab_size))
    params["out_b"] = jnp.zeros((vocab_size,), jnp.float32)
    return params


def im2col_1d(x, K, S, P):
    # TODO(synk): patch extraction still materializes (B, C, L_out, K) in HBM;
    # could be moved in-kernel via manual DMA / pl.ds windows for large L.
    x = jnp.pad(x, ((0, 0), (0, 0), (P, P)))
    B, C, L = x.shape
    L_out = (L - K) // S + 1
    idx = jnp.arange(L_out)[:, None] * S + jnp.arange(K)[None, :]
    patches = x[:, :, idx]                                    # (B, C, L_out, K)
    patches = jnp.transpose(patches, (0, 2, 1, 3)).reshape(B, L_out, C * K)
    return patches, L_out


def downsampling_network(x, params, pool_k):
    B, L = x.shape
    x = x[:, None, :]                                         # unsqueeze(1): (B, 1, L)
    Lp = (L // pool_k) * pool_k                               # AvgPool1d(pool_k)
    x = x[:, :, :Lp].reshape(B, 1, Lp // pool_k, pool_k).mean(axis=-1)
    for conv in params["convs"]:                              # strided Conv1d + GELU
        patches, L_out = im2col_1d(x, conv["kernel"], conv["stride"], conv["pad"])
        C_out, C_in, K = conv["w"].shape
        w2d = conv["w"].reshape(C_out, C_in * K).T
        y = pallas_dense(patches.reshape(B * L_out, C_in * K), w2d, conv["b"],
                         activation="gelu")
        x = y.reshape(B, L_out, C_out).transpose(0, 2, 1)
    return x.transpose(0, 2, 1)                               # (B, T', D)


def transformer(x, params):
    B, T, D = x.shape
    x = x + params["pos_emb"][:T][None, :, :]
    for lyr in params["layers"]:
        xf = x.reshape(B * T, D)
        h = pallas_layernorm(xf, lyr["ln1_g"], lyr["ln1_b"])
        # fused QKV projection: one (D, 3D) matmul
        w_qkv = jnp.concatenate([lyr["wq"], lyr["wk"], lyr["wv"]], axis=1)
        b_qkv = jnp.concatenate([lyr["bq"], lyr["bk"], lyr["bv"]], axis=0)
        qkv = pallas_dense(h, w_qkv, b_qkv)
        q = qkv[:, 0 * D:1 * D].reshape(B, T, D)
        k = qkv[:, 1 * D:2 * D].reshape(B, T, D)
        v = qkv[:, 2 * D:3 * D].reshape(B, T, D)
        a = pallas_flash_attention(q, k, v).reshape(B * T, D)
        xf = pallas_dense(a, lyr["wo"], lyr["bo"], residual=xf)   # fused residual add
        h2 = pallas_layernorm(xf, lyr["ln2_g"], lyr["ln2_b"])
        m = pallas_dense(h2, lyr["w1"], lyr["b1"], activation="gelu")
        xf = pallas_dense(m, lyr["w2"], lyr["b2"], residual=xf)   # fused residual add
        x = xf.reshape(B, T, D)
    return x


def residual_vector_quantize(x, codebooks):
    B, T, D = x.shape
    q, vq_loss = pallas_rvq(x.reshape(B * T, D), codebooks)
    return q.reshape(B, T, D), vq_loss


def transcribe_model_forward(x, params, pool_k):
    h = downsampling_network(x, params, pool_k)               # (B, T', D)
    h = transformer(h, params)                                # (B, T', D)
    B, T, D = h.shape
    hf = pallas_layernorm(h.reshape(B * T, D),
                          params["norm_rvq_g"], params["norm_rvq_b"])
    hq, vq_loss = residual_vector_quantize(hf.reshape(B, T, D), params["codebooks"])
    # fused output projection + log_softmax (logits never round-trip through HBM)
    logp = pallas_dense_logsoftmax(hq.reshape(B * T, D),
                                   params["out_w"], params["out_b"])
    V = params["out_w"].shape[1]
    return logp.reshape(B, T, V), vq_loss


# ----------------------------------- main ------------------------------------

if __name__ == "__main__":
    key = jax.random.PRNGKey(0)
    B, L = 2, 128
    num_codebooks, codebook_size = 2, 8
    embedding_dim, vocab_size = 32, 16
    strides = [2, 2]
    pool_k = 2
    num_transformer_layers = 1
    max_seq_length = 2000

    kx, kp = jax.random.split(key)
    x = jax.random.normal(kx, (B, L), dtype=jnp.float32)
    params = init_params(kp, num_codebooks, codebook_size, embedding_dim,
                         vocab_size, strides, num_transformer_layers, max_seq_length)

    logp, vq_loss = transcribe_model_forward(x, params, pool_k)
    jax.block_until_ready((logp, vq_loss))
    assert logp.shape == (B, 16, vocab_size)
    print("KERNEL_OK")
</pallas_src>

<mosaic_0001>
module attributes {stable_mosaic.version = 11 : i64} {
  func.func @kernel(%arg0: i32, %arg1: i32, %arg2: i32, %arg3: memref<64x128xbf16, #tpu.memory_space<vmem>>, %arg4: memref<128x128xbf16, #tpu.memory_space<vmem>>, %arg5: memref<1x128xf32, #tpu.memory_space<vmem>>, %arg6: memref<64x128xf32, #tpu.memory_space<vmem>>, %arg7: memref<64x128xf32, #tpu.memory_space<vmem>>) attributes {dimension_semantics = [#tpu.dimension_semantics<parallel>, #tpu.dimension_semantics<parallel>, #tpu.dimension_semantics<arbitrary>], iteration_bounds = array<i64: 1, 1, 1>, scalar_prefetch = 0 : i64, scratch_operands = 1 : i64, tpu.core_type = #tpu.core_type<tc>, window_params = [{transform_indices = @transform_0, window_bounds = array<i64: 64, 128>}, {transform_indices = @transform_1, window_bounds = array<i64: 128, 128>}, {transform_indices = @transform_2, window_bounds = array<i64: 1, 128>}, {transform_indices = @transform_3, window_bounds = array<i64: 64, 128>}]} {
    %c0_i32 = arith.constant 0 : i32
    %0 = arith.cmpi eq, %arg2, %c0_i32 : i32
    %1 = arith.extui %0 : i1 to i32
    %c0_i32_0 = arith.constant 0 : i32
    %2 = arith.cmpi ne, %1, %c0_i32_0 : i32
    scf.if %2 {
      %cst_10 = arith.constant 0.000000e+00 : f32
      %12 = vector.broadcast %cst_10 : f32 to vector<64x128xf32>
      %c0_11 = arith.constant 0 : index
      %c0_12 = arith.constant 0 : index
      %13 = vector.load %arg7[%c0_11, %c0_12] : memref<64x128xf32, #tpu.memory_space<vmem>>, vector<64x128xf32>
      tpu.vector_store %arg7[%c0_11, %c0_12], %12 {strides = array<i32>} : memref<64x128xf32, #tpu.memory_space<vmem>>, vector<64x128xf32>,
    } else {
    }
    %c0 = arith.constant 0 : index
    %c0_1 = arith.constant 0 : index
    %3 = vector.load %arg7[%c0, %c0_1] : memref<64x128xf32, #tpu.memory_space<vmem>>, vector<64x128xf32>
    %c0_2 = arith.constant 0 : index
    %c0_3 = arith.constant 0 : index
    %4 = vector.load %arg3[%c0_2, %c0_3] : memref<64x128xbf16, #tpu.memory_space<vmem>>, vector<64x128xbf16>
    %c0_4 = arith.constant 0 : index
    %c0_5 = arith.constant 0 : index
    %5 = vector.load %arg4[%c0_4, %c0_5] : memref<128x128xbf16, #tpu.memory_space<vmem>>, vector<128x128xbf16>
    %cst = arith.constant dense<0.000000e+00> : vector<64x128xf32>
    %6 = tpu.matmul %4, %5, %cst {dimension_numbers = #tpu.dot_dimension_numbers<[1], [0], [0], [1], [0, 0, 1, 1], [], []>} : vector<64x128xbf16>, vector<128x128xbf16>, vector<64x128xf32> -> vector<64x128xf32>
    %7 = arith.addf %3, %6 : vector<64x128xf32>
    %c0_6 = arith.constant 0 : index
    %c0_7 = arith.constant 0 : index
    %8 = vector.load %arg7[%c0_6, %c0_7] : memref<64x128xf32, #tpu.memory_space<vmem>>, vector<64x128xf32>
    tpu.vector_store %arg7[%c0_6, %c0_7], %7 {strides = array<i32>} : memref<64x128xf32, #tpu.memory_space<vmem>>, vector<64x128xf32>,
    %c0_i32_8 = arith.constant 0 : i32
    %9 = arith.cmpi eq, %arg2, %c0_i32_8 : i32
    %10 = arith.extui %9 : i1 to i32
    %c0_i32_9 = arith.constant 0 : i32
    %11 = arith.cmpi ne, %10, %c0_i32_9 : i32
    scf.if %11 {
      %c0_10 = arith.constant 0 : index
      %c0_11 = arith.constant 0 : index
      %12 = vector.load %arg7[%c0_10, %c0_11] : memref<64x128xf32, #tpu.memory_space<vmem>>, vector<64x128xf32>
      %c0_12 = arith.constant 0 : index
      %c0_13 = arith.constant 0 : index
      %13 = vector.load %arg5[%c0_12, %c0_13] : memref<1x128xf32, #tpu.memory_space<vmem>>, vector<1x128xf32>
      %14 = vector.broadcast %13 : vector<1x128xf32> to vector<64x128xf32>
      %15 = arith.addf %12, %14 : vector<64x128xf32>
      %16 = arith.mulf %15, %15 : vector<64x128xf32>
      %17 = arith.mulf %15, %16 : vector<64x128xf32>
      %cst_14 = arith.constant 4.471500e-02 : f32
      %18 = vector.broadcast %cst_14 : f32 to vector<64x128xf32>
      %19 = arith.mulf %18, %17 : vector<64x128xf32>
      %20 = arith.addf %15, %19 : vector<64x128xf32>
      %cst_15 = arith.constant 0.797884583 : f32
      %21 = vector.broadcast %cst_15 : f32 to vector<64x128xf32>
      %22 = arith.mulf %21, %20 : vector<64x128xf32>
      %23 = math.tanh %22 : vector<64x128xf32>
      %cst_16 = arith.constant 1.000000e+00 : f32
      %24 = vector.broadcast %cst_16 : f32 to vector<64x128xf32>
      %25 = arith.addf %24, %23 : vector<64x128xf32>
      %cst_17 = arith.constant 5.000000e-01 : f32
      %26 = vector.broadcast %cst_17 : f32 to vector<64x128xf32>
      %27 = arith.mulf %26, %25 : vector<64x128xf32>
      %28 = arith.mulf %15, %27 : vector<64x128xf32>
      %c0_18 = arith.constant 0 : index
      %c0_19 = arith.constant 0 : index
      %29 = vector.load %arg6[%c0_18, %c0_19] : memref<64x128xf32, #tpu.memory_space<vmem>>, vector<64x128xf32>
      tpu.vector_store %arg6[%c0_18, %c0_19], %28 {strides = array<i32>} : memref<64x128xf32, #tpu.memory_space<vmem>>, vector<64x128xf32>,
    } else {
    }
    return
  }
  func.func @transform_0(%arg0: i32, %arg1: i32, %arg2: i32) -> (i32, i32) {
    %c0_i32 = arith.constant 0 : i32
    return %arg0, %arg2 : i32, i32
  }
  func.func @transform_1(%arg0: i32, %arg1: i32, %arg2: i32) -> (i32, i32) {
    %c0_i32 = arith.constant 0 : i32
    return %arg2, %arg1 : i32, i32
  }
  func.func @transform_2(%arg0: i32, %arg1: i32, %arg2: i32) -> (i32, i32) {
    %c0_i32 = arith.constant 0 : i32
    %c0_i32_0 = arith.constant 0 : i32
    return %c0_i32, %arg1 : i32, i32
  }
  func.func @transform_3(%arg0: i32, %arg1: i32, %arg2: i32) -> (i32, i32) {
    %c0_i32 = arith.constant 0 : i32
    return %arg0, %arg1 : i32, i32
  }
}

</mosaic_0001>

<llo_original>
// kernel: tpu_custom_call.1
$region0: #{tpu_custom_call.1}
  #allocation0 [shape = 'u32[]', space=smem, size = 0x4, offset = 0x4, fixed_abs, tag = 'smem constant byte address 0x4 - core index']
  #allocation1 [shape = 'u32[144,128]{1,0:T(1,128)}', space=vmem, size = 0x12000, scoped, tag = 'internal scratch']
  #allocation2 [shape = 'f32[64,128]{1,0:T(8,128)}', space=vmem, size = 0x8000, scoped, tag = 'scratch operand']
  %s0 = inlined_call_operand.hbm [shape: bf16[64,128], index: 0, kind: input, shape index: {}]
  %s1 = inlined_call_operand.hbm [shape: bf16[128,128], index: 1, kind: input, shape index: {}]
  %s2 = inlined_call_operand.vmem [shape: f32[1,128], index: 2, kind: input, shape index: {}]
  %s3 = inlined_call_operand.hbm [shape: f32[64,128], index: 3, kind: output, shape index: {}]
  %s4 = sld [smem:[#allocation0]]
  $region38: #{tpu_custom_call.1} parent=0
    _
  %s6 = ssub.s32 1, %s4
  %s7 = scalar_select 0, %s6, %s4
  $region1: #{tpu_custom_call.1} parent=0
    #allocation3 [shape = 'u8[16384]{0}', space=vmem, size = 0x4000, scoped, tag = 'input window, operand 0, single buffered']
    #allocation4 [shape = 's32[1]{0}', space=sflag, size = 0x4, scoped, tag = 'scoped memory for tpu_custom_call.1']
    #allocation5 [shape = 's32[1]{0}', space=sflag, size = 0x4, scoped, tag = 'scoped memory for tpu_custom_call.1']
    #allocation6 [shape = 'u8[32768]{0}', space=vmem, size = 0x8000, scoped, tag = 'input window, operand 1, single buffered']
    #allocation7 [shape = 's32[1]{0}', space=sflag, size = 0x4, scoped, tag = 'scoped memory for tpu_custom_call.1']
    #allocation8 [shape = 'u8[32768]{0}', space=vmem, size = 0x8000, scoped, tag = 'output window, operand 0, single buffered']
    %8 = vsyncpa [#allocation4], 0
    %9 = vsyncpa [#allocation7], 0
    %10 = vsyncpa [#allocation5], 0
    // Predicated region
    $region2: #{tpu_custom_call.1} parent=1 // pred_check
      _
    $region3: #{tpu_custom_call.1} parent=1 // pred_check_branch
      %12 = sbr.rel (0) target = $region5
    $region4: #{tpu_custom_call.1} parent=1 // pred_region
      %s14 = ssub.s32 512, 512
      %15 = vsyncadd [#allocation4], %s14
      %s16 = sshll.u32 [#allocation3], 4
      %s17 = int_to_ptr.vmem [resolvable:$true] %s16
      %22 = dma.hbm_to_vmem [thread:$0]  %s0, 512, %s17, [#allocation4], 64, 64, 4
    $region5: #{tpu_custom_call.1} parent=1 // pred_fallthru
      _
    // Predicated region
    $region6: #{tpu_custom_call.1} parent=1 // pred_check
      _
    $region7: #{tpu_custom_call.1} parent=1 // pred_check_branch
      %24 = sbr.rel (0) target = $region9
    $region8: #{tpu_custom_call.1} parent=1 // pred_region
      %s26 = ssub.s32 1024, 1024
      %27 = vsyncadd [#allocation7], %s26
      %s28 = sshll.u32 [#allocation6], 4
      %s29 = int_to_ptr.vmem [resolvable:$true] %s28
      %34 = dma.hbm_to_vmem [thread:$0]  %s1, 1024, %s29, [#allocation7], 64, 64, 4
    $region9: #{tpu_custom_call.1} parent=1 // pred_fallthru
      _
    // Predicated region
    $region10: #{tpu_custom_call.1} parent=1 // pred_check
      _
    $region11: #{tpu_custom_call.1} parent=1 // pred_check_branch
      %36 = sbr.rel (0) target = $region13
    $region12: #{tpu_custom_call.1} parent=1 // pred_region
      _
    $region13: #{tpu_custom_call.1} parent=1 // pred_fallthru
      _
    // Predicated region
    $region14: #{tpu_custom_call.1} parent=1 // pred_check
      _
    $region15: #{tpu_custom_call.1} parent=1 // pred_check_branch
      %38 = sbr.rel (0) target = $region17
    $region16: #{tpu_custom_call.1} parent=1 // pred_region
      %39 = dma.done [#allocation4], 512
    $region17: #{tpu_custom_call.1} parent=1 // pred_fallthru
      _
    // Predicated region
    $region18: #{tpu_custom_call.1} parent=1 // pred_check
      _
    $region19: #{tpu_custom_call.1} parent=1 // pred_check_branch
      %41 = sbr.rel (0) target = $region21
    $region20: #{tpu_custom_call.1} parent=1 // pred_region
      %42 = dma.done [#allocation7], 1024
    $region21: #{tpu_custom_call.1} parent=1 // pred_fallthru
      _
    %p44 = scmp.eq.s32.totalorder 0, 0
    // Predicated region
    $region22: #{tpu_custom_call.1} parent=1 // pred_check
      %p45 = pneg %p44
    $region23: #{tpu_custom_call.1} parent=1 // pred_check_branch
      %47 = sbr.rel (%p45) target = $region25
    $region24: #{tpu_custom_call.1} parent=1 // pred_region
      %48 = vst [vmem:[#allocation2] sm:$0xff] 0.0
      %49 = vst [vmem:[#allocation2 + $0x8] sm:$0xff] 0.0
      %50 = vst [vmem:[#allocation2 + $0x10] sm:$0xff] 0.0
      %51 = vst [vmem:[#allocation2 + $0x18] sm:$0xff] 0.0
      %52 = vst [vmem:[#allocation2 + $0x20] sm:$0xff] 0.0
      %53 = vst [vmem:[#allocation2 + $0x28] sm:$0xff] 0.0
      %54 = vst [vmem:[#allocation2 + $0x30] sm:$0xff] 0.0
      %55 = vst [vmem:[#allocation2 + $0x38] sm:$0xff] 0.0
    $region25: #{tpu_custom_call.1} parent=1 // pred_fallthru
      _
    %v56 = vld [vmem:[#allocation2] sm:$0xff]
    %v57 = vld [vmem:[#allocation2 + $0x8] sm:$0xff]
    %v58 = vld [vmem:[#allocation2 + $0x10] sm:$0xff]
    %v59 = vld [vmem:[#allocation2 + $0x18] sm:$0xff]
    %v60 = vld [vmem:[#allocation2 + $0x20] sm:$0xff]
    %v61 = vld [vmem:[#allocation2 + $0x28] sm:$0xff]
    %v62 = vld [vmem:[#allocation2 + $0x30] sm:$0xff]
    %v63 = vld [vmem:[#allocation2 + $0x38] sm:$0xff]
    %v64 = vld [vmem:[#allocation3] sm:$0xf]
    %v65 = vld [vmem:[#allocation3 + $0x4] sm:$0xf]
    %v66 = vld [vmem:[#allocation3 + $0x8] sm:$0xf]
    %v67 = vld [vmem:[#allocation3 + $0xc] sm:$0xf]
    %v68 = vld [vmem:[#allocation3 + $0x10] sm:$0xf]
    %v69 = vld [vmem:[#allocation3 + $0x14] sm:$0xf]
    %v70 = vld [vmem:[#allocation3 + $0x18] sm:$0xf]
    %v71 = vld [vmem:[#allocation3 + $0x1c] sm:$0xf]
    %v72 = vld [vmem:[#allocation6] sm:$0xf]
    %v73 = vld [vmem:[#allocation6 + $0x4] sm:$0xf]
    %v74 = vld [vmem:[#allocation6 + $0x8] sm:$0xf]
    %v75 = vld [vmem:[#allocation6 + $0xc] sm:$0xf]
    %v76 = vld [vmem:[#allocation6 + $0x10] sm:$0xf]
    %v77 = vld [vmem:[#allocation6 + $0x14] sm:$0xf]
    %v78 = vld [vmem:[#allocation6 + $0x18] sm:$0xf]
    %v79 = vld [vmem:[#allocation6 + $0x1c] sm:$0xf]
    %v80 = vld [vmem:[#allocation6 + $0x20] sm:$0xf]
    %v81 = vld [vmem:[#allocation6 + $0x24] sm:$0xf]
    %v82 = vld [vmem:[#allocation6 + $0x28] sm:$0xf]
    %v83 = vld [vmem:[#allocation6 + $0x2c] sm:$0xf]
    %v84 = vld [vmem:[#allocation6 + $0x30] sm:$0xf]
    %v85 = vld [vmem:[#allocation6 + $0x34] sm:$0xf]
    %v86 = vld [vmem:[#allocation6 + $0x38] sm:$0xf]
    %v87 = vld [vmem:[#allocation6 + $0x3c] sm:$0xf]
    %v96 = vunpack.c.l.b16 %v64
    %v97 = vunpack.c.l.b16 %v65
    %v98 = vunpack.c.l.b16 %v66
    %v99 = vunpack.c.l.b16 %v67
    %v100 = vunpack.c.l.b16 %v68
    %v101 = vunpack.c.l.b16 %v69
    %v102 = vunpack.c.l.b16 %v70
    %v103 = vunpack.c.l.b16 %v71
    %v104 = vpack.c.b16 %v97, %v96
    %v105 = vpack.c.b16 %v99, %v98
    %v106 = vpack.c.b16 %v101, %v100
    %v107 = vpack.c.b16 %v103, %v102
    %v128 = vunpack.c.l.b16 %v72
    %v129 = vunpack.c.l.b16 %v73
    %v130 = vunpack.c.l.b16 %v74
    %v131 = vunpack.c.l.b16 %v75
    %v132 = vunpack.c.l.b16 %v76
    %v133 = vunpack.c.l.b16 %v77
    %v134 = vunpack.c.l.b16 %v78
    %v135 = vunpack.c.l.b16 %v79
    %v136 = vunpack.c.l.b16 %v80
    %v137 = vunpack.c.l.b16 %v81
    %v138 = vunpack.c.l.b16 %v82
    %v139 = vunpack.c.l.b16 %v83
    %v140 = vunpack.c.l.b16 %v84
    %v141 = vunpack.c.l.b16 %v85
    %v142 = vunpack.c.l.b16 %v86
    %v143 = vunpack.c.l.b16 %v87
    %v144 = vpack.c.b16 %v129, %v128
    %v145 = vpack.c.b16 %v131, %v130
    %v146 = vpack.c.b16 %v133, %v132
    %v147 = vpack.c.b16 %v135, %v134
    %v148 = vpack.c.b16 %v137, %v136
    %v149 = vpack.c.b16 %v139, %v138
    %v150 = vpack.c.b16 %v141, %v140
    %v151 = vpack.c.b16 %v143, %v142
    %160 = vmatprep.subr.bf16.mxu0 0
    %161 = vmatpush1.bf16.msra.mxu0 %v144
    %162 = vmatprep.subr.bf16.mxu0 0
    %163 = vmatpush1.bf16.msra.mxu0 %v145
    %164 = vmatprep.subr.bf16.mxu0 0
    %165 = vmatpush1.bf16.msra.mxu0 %v146
    %166 = vmatprep.subr.bf16.mxu0 0
    %167 = vmatpush1.bf16.msra.mxu0 %v147
    %168 = vmatprep.subr.bf16.mxu0 0
    %169 = vmatpush1.bf16.msra.mxu0 %v148
    %170 = vmatprep.subr.bf16.mxu0 0
    %171 = vmatpush1.bf16.msra.mxu0 %v149
    %172 = vmatprep.subr.bf16.mxu0 0
    %173 = vmatpush1.bf16.msra.mxu0 %v150
    %174 = vmatprep.subr.bf16.mxu0 0
    %175 = vmatpush1.bf16.msra.mxu0 %v151
    %176 = vmatprep.subr.bf16.mxu0 0
    %177 = vmatpush1.bf16.msra.mxu0 0
    %178 = vmatprep.subr.bf16.mxu0 0
    %179 = vmatpush1.bf16.msra.mxu0 0
    %180 = vmatprep.subr.bf16.mxu0 0
    %181 = vmatpush1.bf16.msra.mxu0 0
    %182 = vmatprep.subr.bf16.mxu0 0
    %183 = vmatpush1.bf16.msra.mxu0 0
    %184 = vmatprep.subr.bf16.mxu0 0
    %185 = vmatpush1.bf16.msra.mxu0 0
    %186 = vmatprep.subr.bf16.mxu0 0
    %187 = vmatpush1.bf16.msra.mxu0 0
    %188 = vmatprep.subr.bf16.mxu0 0
    %189 = vmatpush1.bf16.msra.mxu0 0
    %190 = vmatprep.subr.bf16.mxu0 0
    %191 = vmatpush1.bf16.msra.mxu0 0
    %192 = vmatprep.mubr.bf16.mxu0 0
    %193 = vmatmul.mubr.bf16.gmra.mrb[0].mxu0 %v104
    %v194 = vpop.f32.mrb[0].mxu0
    %v195 = vadd.f32 0.0, %v194
    %v196 = vpop.f32.mrb[0].mxu0
    %v197 = vpop.f32.mrb[0].mxu0
    %v198 = vadd.f32 0.0, %v197
    %v199 = vpop.f32.mrb[0].mxu0
    %200 = vmatprep.mubr.bf16.mxu0 0
    %201 = vmatmul.mubr.bf16.gmra.mrb[0].mxu0 %v105
    %v202 = vpop.f32.mrb[0].mxu0
    %v203 = vadd.f32 0.0, %v202
    %v204 = vpop.f32.mrb[0].mxu0
    %v205 = vpop.f32.mrb[0].mxu0
    %v206 = vadd.f32 0.0, %v205
    %v207 = vpop.f32.mrb[0].mxu0
    %208 = vmatprep.mubr.bf16.mxu0 0
    %209 = vmatmul.mubr.bf16.gmra.mrb[0].mxu0 %v106
    %v210 = vpop.f32.mrb[0].mxu0
    %v211 = vadd.f32 0.0, %v210
    %v212 = vpop.f32.mrb[0].mxu0
    %v213 = vpop.f32.mrb[0].mxu0
    %v214 = vadd.f32 0.0, %v213
    %v215 = vpop.f32.mrb[0].mxu0
    %216 = vmatprep.mubr.bf16.mxu0 0
    %217 = vmatmul.mubr.bf16.gmra.mrb[0].mxu0 %v107
    %v218 = vpop.f32.mrb[0].mxu0
    %v219 = vadd.f32 0.0, %v218
    %v220 = vpop.f32.mrb[0].mxu0
    %v221 = vpop.f32.mrb[0].mxu0
    %v222 = vadd.f32 0.0, %v221
    %v223 = vpop.f32.mrb[0].mxu0
    %224 = vdwg.mxu0
    %v225 = vadd.f32 %v56, %v195
    %v226 = vadd.f32 %v57, %v198
    %v227 = vadd.f32 %v58, %v203
    %v228 = vadd.f32 %v59, %v206
    %v229 = vadd.f32 %v60, %v211
    %v230 = vadd.f32 %v61, %v214
    %v231 = vadd.f32 %v62, %v219
    %v232 = vadd.f32 %v63, %v222
    %233 = vst [vmem:[#allocation2] sm:$0xff] %v225
    %234 = vst [vmem:[#allocation2 + $0x8] sm:$0xff] %v226
    %235 = vst [vmem:[#allocation2 + $0x10] sm:$0xff] %v227
    %236 = vst [vmem:[#allocation2 + $0x18] sm:$0xff] %v228
    %237 = vst [vmem:[#allocation2 + $0x20] sm:$0xff] %v229
    %238 = vst [vmem:[#allocation2 + $0x28] sm:$0xff] %v230
    %239 = vst [vmem:[#allocation2 + $0x30] sm:$0xff] %v231
    %240 = vst [vmem:[#allocation2 + $0x38] sm:$0xff] %v232
    // Predicated region
    $region26: #{tpu_custom_call.1} parent=1 // pred_check
      %p241 = pneg %p44
    $region27: #{tpu_custom_call.1} parent=1 // pred_check_branch
      %243 = sbr.rel (%p241) target = $region29
    $region28: #{tpu_custom_call.1} parent=1 // pred_region
      %v244 = vld [vmem:[#allocation2] sm:$0xff]
      %v245 = vld [vmem:[#allocation2 + $0x8] sm:$0xff]
      %v246 = vld [vmem:[#allocation2 + $0x10] sm:$0xff]
      %v247 = vld [vmem:[#allocation2 + $0x18] sm:$0xff]
      %v248 = vld [vmem:[#allocation2 + $0x20] sm:$0xff]
      %v249 = vld [vmem:[#allocation2 + $0x28] sm:$0xff]
      %v250 = vld [vmem:[#allocation2 + $0x30] sm:$0xff]
      %v251 = vld [vmem:[#allocation2 + $0x38] sm:$0xff]
      %v252 = vld [vmem:[%s2] sm:$0x1]
      %v254 = vlaneseq
      %v255 = vshrl.u32 %v254, 7
      %v256 = vsub.s32 0, %v255
      %v257 = vrot.slane %v252, %v256
      %v259 = vadd.f32 %v244, %v257
      %v260 = vadd.f32 %v245, %v257
      %v261 = vadd.f32 %v246, %v257
      %v262 = vadd.f32 %v247, %v257
      %v263 = vadd.f32 %v248, %v257
      %v264 = vadd.f32 %v249, %v257
      %v265 = vadd.f32 %v250, %v257
      %v266 = vadd.f32 %v251, %v257
      %v267 = vmul.f32 %v259, %v259
      %v268 = vmul.f32 %v260, %v260
      %v269 = vmul.f32 %v261, %v261
      %v270 = vmul.f32 %v262, %v262
      %v271 = vmul.f32 %v263, %v263
      %v272 = vmul.f32 %v264, %v264
      %v273 = vmul.f32 %v265, %v265
      %v274 = vmul.f32 %v266, %v266
      %v275 = vmul.f32 %v259, %v267
      %v276 = vmul.f32 %v260, %v268
      %v277 = vmul.f32 %v261, %v269
      %v278 = vmul.f32 %v262, %v270
      %v279 = vmul.f32 %v263, %v271
      %v280 = vmul.f32 %v264, %v272
      %v281 = vmul.f32 %v265, %v273
      %v282 = vmul.f32 %v266, %v274
      %v283 = vmul.f32 %v275, 0.044715
      %v284 = vmul.f32 %v276, 0.044715
      %v285 = vmul.f32 %v277, 0.044715
      %v286 = vmul.f32 %v278, 0.044715
      %v287 = vmul.f32 %v279, 0.044715
      %v288 = vmul.f32 %v280, 0.044715
      %v289 = vmul.f32 %v281, 0.044715
      %v290 = vmul.f32 %v282, 0.044715
      %v291 = vadd.f32 %v259, %v283
      %v292 = vadd.f32 %v260, %v284
      %v293 = vadd.f32 %v261, %v285
      %v294 = vadd.f32 %v262, %v286
      %v295 = vadd.f32 %v263, %v287
      %v296 = vadd.f32 %v264, %v288
      %v297 = vadd.f32 %v265, %v289
      %v298 = vadd.f32 %v266, %v290
      %v299 = vmul.f32 %v291, 0.7978846
      %v300 = vmul.f32 %v292, 0.7978846
      %v301 = vmul.f32 %v293, 0.7978846
      %v302 = vmul.f32 %v294, 0.7978846
      %v303 = vmul.f32 %v295, 0.7978846
      %v304 = vmul.f32 %v296, 0.7978846
      %v305 = vmul.f32 %v297, 0.7978846
      %v306 = vmul.f32 %v298, 0.7978846
      %v307 = vtanh.pop %v299
      %v308 = vtanh.pop %v300
      %v309 = vtanh.pop %v301
      %v310 = vtanh.pop %v302
      %v311 = vtanh.pop %v303
      %v312 = vtanh.pop %v304
      %v313 = vtanh.pop %v305
      %v314 = vtanh.pop %v306
      %v315 = vadd.f32 %v307, 1.0
      %v316 = vadd.f32 %v308, 1.0
      %v317 = vadd.f32 %v309, 1.0
      %v318 = vadd.f32 %v310, 1.0
      %v319 = vadd.f32 %v311, 1.0
      %v320 = vadd.f32 %v312, 1.0
      %v321 = vadd.f32 %v313, 1.0
      %v322 = vadd.f32 %v314, 1.0
      %v323 = vmul.f32 %v315, 0.5
      %v324 = vmul.f32 %v316, 0.5
      %v325 = vmul.f32 %v317, 0.5
      %v326 = vmul.f32 %v318, 0.5
      %v327 = vmul.f32 %v319, 0.5
      %v328 = vmul.f32 %v320, 0.5
      %v329 = vmul.f32 %v321, 0.5
      %v330 = vmul.f32 %v322, 0.5
      %v331 = vmul.f32 %v259, %v323
      %v332 = vmul.f32 %v260, %v324
      %v333 = vmul.f32 %v261, %v325
      %v334 = vmul.f32 %v262, %v326
      %v335 = vmul.f32 %v263, %v327
      %v336 = vmul.f32 %v264, %v328
      %v337 = vmul.f32 %v265, %v329
      %v338 = vmul.f32 %v266, %v330
      %339 = vst [vmem:[#allocation8] sm:$0xff] %v331
      %340 = vst [vmem:[#allocation8 + $0x8] sm:$0xff] %v332
      %341 = vst [vmem:[#allocation8 + $0x10] sm:$0xff] %v333
      %342 = vst [vmem:[#allocation8 + $0x18] sm:$0xff] %v334
      %343 = vst [vmem:[#allocation8 + $0x20] sm:$0xff] %v335
      %344 = vst [vmem:[#allocation8 + $0x28] sm:$0xff] %v336
      %345 = vst [vmem:[#allocation8 + $0x30] sm:$0xff] %v337
      %346 = vst [vmem:[#allocation8 + $0x38] sm:$0xff] %v338
    $region29: #{tpu_custom_call.1} parent=1 // pred_fallthru
      _
    // Predicated region
    $region30: #{tpu_custom_call.1} parent=1 // pred_check
      _
    $region31: #{tpu_custom_call.1} parent=1 // pred_check_branch
      %348 = sbr.rel (0) target = $region33
    $region32: #{tpu_custom_call.1} parent=1 // pred_region
      %s350 = ssub.s32 1024, 1024
      %351 = vsyncadd [#allocation5], %s350
      %s352 = sshll.u32 [#allocation8], 4
      %s353 = int_to_ptr.vmem [resolvable:$true] %s352
      %358 = dma.vmem_to_hbm [thread:$0]  %s353, 1024, %s3, [#allocation5], 128, 128, 8
    $region33: #{tpu_custom_call.1} parent=1 // pred_fallthru
      _
    // Predicated region
    $region34: #{tpu_custom_call.1} parent=1 // pred_check
      _
    $region35: #{tpu_custom_call.1} parent=1 // pred_check_branch
      %360 = sbr.rel (0) target = $region37
    $region36: #{tpu_custom_call.1} parent=1 // pred_region
      %361 = dma.done [#allocation5], 1024
    $region37: #{tpu_custom_call.1} parent=1 // pred_fallthru
      _
    %362 = vsyncpa [#allocation4], 1
    %363 = vsyncpa [#allocation7], 1
    %364 = vsyncpa [#allocation5], 1

</llo_original>
